<compile_context>
chip_gen: v5e
topology: v5e:2x2
jax: 0.10.0
libtpu: 0.0.40
codegen_flags: <defaults>
</compile_context>

<pallas_src>
import math
import numpy as np
import jax
import jax.numpy as jnp
from jax.experimental import pallas as pl
from jax.experimental.pallas import tpu as pltpu


# ------------------------------------------------------------------ kernel ---

def _embedding_kernel(x_ref, w1_ref, w2_ref, w3_ref, out_ref):
    # x_ref: (TM, F) block of flattened (sample, time) rows.
    # w*_ref: BN-folded 1x1-conv weights, resident in VMEM for every step.
    mm_dtype = w1_ref.dtype                       # matmul operand dtype (f32 or bf16)
    x = x_ref[...].astype(mm_dtype)

    a1 = jnp.maximum(
        jnp.dot(x, w1_ref[...], preferred_element_type=jnp.float32), 0.0)
    a2 = jnp.maximum(
        jnp.dot(a1.astype(mm_dtype), w2_ref[...], preferred_element_type=jnp.float32), 0.0)
    emb = jnp.maximum(
        jnp.dot(a2.astype(mm_dtype), w3_ref[...], preferred_element_type=jnp.float32), 0.0)

    out_ref[...] = emb.astype(out_ref.dtype)      # lane-dense (TM, H) store


# ----------------------------------------------------------------- wrapper ---

def _round_up(v, m):
    return ((v + m - 1) // m) * m


def fold_bn_into_weights(params):
    """Fold eval-mode BN scales into adjacent conv weights (order-preserving)."""
    w1f = params["s0"][:, None] * params["w1t"] * params["s1"][None, :]
    w2f = params["w2t"] * params["s2"][None, :]
    w3f = params["w3t"] * params["s3"][None, :]
    return w1f, w2f, w3f


def embedding_layers(x, params, *, block_rows=512, matmul_dtype=jnp.float32):
    """EmbeddingLayers forward (eval mode).

    x: (N, T, F) float32, channels-last input (samples, time_steps, freq_bins).
    Returns emb: (N, T, H) float32 == PyTorch emb[:, :, :, 0].transpose(1, 2).
    """
    N, T, F = x.shape
    w1f, w2f, w3f = fold_bn_into_weights(params)
    H = w3f.shape[1]

    w1f = w1f.astype(matmul_dtype)
    w2f = w2f.astype(matmul_dtype)
    w3f = w3f.astype(matmul_dtype)

    # Flatten (N, T) -> rows; every op is row-independent (1x1 convs + BN + ReLU).
    M = N * T
    tm = min(block_rows, _round_up(M, 8))         # sublane-aligned row tile
    m_pad = _round_up(M, tm)
    x2 = x.reshape(M, F)
    if m_pad != M:
        x2 = jnp.pad(x2, ((0, m_pad - M), (0, 0)))
    grid = (m_pad // tm,)

    # Explicit VMEM budget from tile footprint (keeps v7x's 64 MiB VMEM safe).
    mm_bytes = np.dtype(matmul_dtype).itemsize
    est = (2 * tm * F * 4                          # double-buffered input blocks
           + 2 * tm * H * 4                        # double-buffered output blocks
           + 2 * (F * H + 2 * H * H) * mm_bytes    # weights
           + 3 * tm * H * 4)                       # live f32 activations
    vmem_limit = int(min(100 * 1024 * 1024, max(32 * 1024 * 1024, 4 * est)))

    def full_spec(a):
        return pl.BlockSpec(a.shape, lambda i: (0, 0))

    out = pl.pallas_call(
        _embedding_kernel,
        out_shape=jax.ShapeDtypeStruct((m_pad, H), jnp.float32),
        grid=grid,
        in_specs=[pl.BlockSpec((tm, F), lambda i: (i, 0)),
                  full_spec(w1f), full_spec(w2f), full_spec(w3f)],
        out_specs=pl.BlockSpec((tm, H), lambda i: (i, 0)),
        compiler_params=pltpu.CompilerParams(
            dimension_semantics=("parallel",),
            vmem_limit_bytes=vmem_limit),
    )(x2, w1f, w2f, w3f)

    return out[:M].reshape(N, T, H)


# ------------------------------------------------------------ param helpers ---

def _init_conv1x1(key, n_out, n_in):
    """Matches init_layer for a (n_out, n_in, 1, 1) conv: n = n_in * 1 * 1."""
    std = math.sqrt(2.0 / n_in)
    scale = std * math.sqrt(3.0)
    return jax.random.uniform(key, (n_out, n_in), jnp.float32, -scale, scale)


def make_params(key, freq_bins, hidden_units, bn_eps=1e-5):
    ks = jax.random.split(key, 3)
    F, H = freq_bins, hidden_units
    # init_bn: gamma=1 (beta=0, running mean=0, var=1) -> eval BN is x / sqrt(1+eps).
    bn_scale = 1.0 / math.sqrt(1.0 + bn_eps)
    return {
        "w1t": _init_conv1x1(ks[0], H, F).T,      # (F, H)
        "w2t": _init_conv1x1(ks[1], H, H).T,      # (H, H)
        "w3t": _init_conv1x1(ks[2], H, H).T,      # (H, H)
        "s0": jnp.full((F,), bn_scale, jnp.float32),
        "s1": jnp.full((H,), bn_scale, jnp.float32),
        "s2": jnp.full((H,), bn_scale, jnp.float32),
        "s3": jnp.full((H,), bn_scale, jnp.float32),
    }


# ------------------------------------------------------------ JAX reference ---

def reference_forward(x, p):
    """Unfolded channels-last reference (mirrors the PyTorch op order)."""
    a0 = x * p["s0"]
    a1 = jnp.maximum((a0 @ p["w1t"]) * p["s1"], 0.0)
    a2 = jnp.maximum((a1 @ p["w2t"]) * p["s2"], 0.0)
    emb = jnp.maximum((a2 @ p["w3t"]) * p["s3"], 0.0)
    return emb                                    # (N, T, H)


# --------------------------------------------------------------------- main ---

if __name__ == "__main__":
    # (samples_num, time_steps, freq_bins, hidden_units)
    N, T, F, H = 16, 8, 16, 32

    key = jax.random.PRNGKey(0)
    kx, kp = jax.random.split(key)
    x = jax.random.normal(kx, (N, T, F), jnp.float32)
    params = make_params(kp, freq_bins=F, hidden_units=H)

    ref = reference_forward(x, params)

    # f32 matmuls (exact path); block_rows=64 -> 2 parallel grid steps at this size.
    out = embedding_layers(x, params, block_rows=64, matmul_dtype=jnp.float32)
    out = jax.block_until_ready(out)
    np.testing.assert_allclose(np.asarray(out), np.asarray(ref), rtol=1e-4, atol=1e-4)

    # bf16 matmul operands (recommended on v6e/v7x), f32 accumulation/elementwise.
    out_bf16 = embedding_layers(x, params, block_rows=64, matmul_dtype=jnp.bfloat16)
    out_bf16 = jax.block_until_ready(out_bf16)
    np.testing.assert_allclose(np.asarray(out_bf16), np.asarray(ref), rtol=5e-2, atol=5e-2)

    print("KERNEL_OK")
</pallas_src>

<mosaic_0001>
module attributes {stable_mosaic.version = 11 : i64} {
  func.func @_embedding_kernel(%arg0: i32, %arg1: memref<64x16xf32, #tpu.memory_space<vmem>>, %arg2: memref<16x32xf32, #tpu.memory_space<vmem>>, %arg3: memref<32x32xf32, #tpu.memory_space<vmem>>, %arg4: memref<32x32xf32, #tpu.memory_space<vmem>>, %arg5: memref<64x32xf32, #tpu.memory_space<vmem>>) attributes {dimension_semantics = [#tpu.dimension_semantics<parallel>], iteration_bounds = array<i64: 2>, scalar_prefetch = 0 : i64, scratch_operands = 0 : i64, tpu.core_type = #tpu.core_type<tc>, window_params = [{transform_indices = @transform_0, window_bounds = array<i64: 64, 16>}, {pipeline_mode = #tpu.pipeline_mode<synchronous>, transform_indices = @transform_1, window_bounds = array<i64: 16, 32>}, {pipeline_mode = #tpu.pipeline_mode<synchronous>, transform_indices = @transform_2, window_bounds = array<i64: 32, 32>}, {pipeline_mode = #tpu.pipeline_mode<synchronous>, transform_indices = @transform_3, window_bounds = array<i64: 32, 32>}, {transform_indices = @transform_4, window_bounds = array<i64: 64, 32>}]} {
    %c0 = arith.constant 0 : index
    %c0_0 = arith.constant 0 : index
    %0 = vector.load %arg1[%c0, %c0_0] : memref<64x16xf32, #tpu.memory_space<vmem>>, vector<64x16xf32>
    %c0_1 = arith.constant 0 : index
    %c0_2 = arith.constant 0 : index
    %1 = vector.load %arg2[%c0_1, %c0_2] : memref<16x32xf32, #tpu.memory_space<vmem>>, vector<16x32xf32>
    %cst = arith.constant dense<0.000000e+00> : vector<64x32xf32>
    %2 = tpu.matmul %0, %1, %cst {dimension_numbers = #tpu.dot_dimension_numbers<[1], [0], [0], [1], [0, 0, 1, 1], [], []>} : vector<64x16xf32>, vector<16x32xf32>, vector<64x32xf32> -> vector<64x32xf32>
    %cst_3 = arith.constant 0.000000e+00 : f32
    %3 = vector.broadcast %cst_3 : f32 to vector<64x32xf32>
    %4 = arith.maximumf %2, %3 : vector<64x32xf32>
    %c0_4 = arith.constant 0 : index
    %c0_5 = arith.constant 0 : index
    %5 = vector.load %arg3[%c0_4, %c0_5] : memref<32x32xf32, #tpu.memory_space<vmem>>, vector<32x32xf32>
    %cst_6 = arith.constant dense<0.000000e+00> : vector<64x32xf32>
    %6 = tpu.matmul %4, %5, %cst_6 {dimension_numbers = #tpu.dot_dimension_numbers<[1], [0], [0], [1], [0, 0, 1, 1], [], []>} : vector<64x32xf32>, vector<32x32xf32>, vector<64x32xf32> -> vector<64x32xf32>
    %cst_7 = arith.constant 0.000000e+00 : f32
    %7 = vector.broadcast %cst_7 : f32 to vector<64x32xf32>
    %8 = arith.maximumf %6, %7 : vector<64x32xf32>
    %c0_8 = arith.constant 0 : index
    %c0_9 = arith.constant 0 : index
    %9 = vector.load %arg4[%c0_8, %c0_9] : memref<32x32xf32, #tpu.memory_space<vmem>>, vector<32x32xf32>
    %cst_10 = arith.constant dense<0.000000e+00> : vector<64x32xf32>
    %10 = tpu.matmul %8, %9, %cst_10 {dimension_numbers = #tpu.dot_dimension_numbers<[1], [0], [0], [1], [0, 0, 1, 1], [], []>} : vector<64x32xf32>, vector<32x32xf32>, vector<64x32xf32> -> vector<64x32xf32>
    %cst_11 = arith.constant 0.000000e+00 : f32
    %11 = vector.broadcast %cst_11 : f32 to vector<64x32xf32>
    %12 = arith.maximumf %10, %11 : vector<64x32xf32>
    %c0_12 = arith.constant 0 : index
    %c0_13 = arith.constant 0 : index
    %13 = vector.load %arg5[%c0_12, %c0_13] : memref<64x32xf32, #tpu.memory_space<vmem>>, vector<64x32xf32>
    tpu.vector_store %arg5[%c0_12, %c0_13], %12 {strides = array<i32>} : memref<64x32xf32, #tpu.memory_space<vmem>>, vector<64x32xf32>,
    return
  }
  func.func @transform_0(%arg0: i32) -> (i32, i32) {
    %c0_i32 = arith.constant 0 : i32
    %c0_i32_0 = arith.constant 0 : i32
    return %arg0, %c0_i32 : i32, i32
  }
  func.func @transform_1(%arg0: i32) -> (i32, i32) {
    %c0_i32 = arith.constant 0 : i32
    %c0_i32_0 = arith.constant 0 : i32
    %c0_i32_1 = arith.constant 0 : i32
    return %c0_i32, %c0_i32_0 : i32, i32
  }
  func.func @transform_2(%arg0: i32) -> (i32, i32) {
    %c0_i32 = arith.constant 0 : i32
    %c0_i32_0 = arith.constant 0 : i32
    %c0_i32_1 = arith.constant 0 : i32
    return %c0_i32, %c0_i32_0 : i32, i32
  }
  func.func @transform_3(%arg0: i32) -> (i32, i32) {
    %c0_i32 = arith.constant 0 : i32
    %c0_i32_0 = arith.constant 0 : i32
    %c0_i32_1 = arith.constant 0 : i32
    return %c0_i32, %c0_i32_0 : i32, i32
  }
  func.func @transform_4(%arg0: i32) -> (i32, i32) {
    %c0_i32 = arith.constant 0 : i32
    %c0_i32_0 = arith.constant 0 : i32
    return %arg0, %c0_i32 : i32, i32
  }
}

</mosaic_0001>

<llo_original>
// kernel: tpu_custom_call.1
$region0: #{tpu_custom_call.1}
  #allocation0 [shape = 'u32[]', space=smem, size = 0x4, offset = 0x4, fixed_abs, tag = 'smem constant byte address 0x4 - core index']
  #allocation1 [shape = 'u32[72,128]{1,0:T(1,128)}', space=vmem, size = 0x9000, scoped, tag = 'internal scratch']
  %s0 = inlined_call_operand.vmem [shape: f32[128,16], index: 0, kind: input, shape index: {}]
  %s1 = inlined_call_operand.vmem [shape: f32[16,32], index: 1, kind: input, shape index: {}]
  %s2 = inlined_call_operand.vmem [shape: f32[32,32], index: 2, kind: input, shape index: {}]
  %s3 = inlined_call_operand.vmem [shape: f32[32,32], index: 3, kind: input, shape index: {}]
  %s4 = inlined_call_operand.vmem [shape: f32[128,32], index: 4, kind: output, shape index: {}]
  %s5 = sld [smem:[#allocation0]]
  $region49: #{tpu_custom_call.1} parent=0
    _
  %s7 = ssub.s32 1, %s5
  %s8 = scalar_select 0, %s7, %s5
  loop: start=0, step=1, limit=4
  $region2: #{tpu_custom_call.1} parent=0 // loop_pre_header
    _
  $region3: #{tpu_custom_call.1} parent=0 // loop_header
    %s10 = sphi 0, %s14
    %p11 = scmp.ge.s32.totalorder %s10, 4
    %s20 = sphi 0, %s22
    %s23 = sphi 0, %s20
    %s24 = sphi 0, %s23
    %s40 = sphi 0, %s24
    %s44 = sphi 0, %s44
    %s46 = sphi 0, %s44
    %s47 = sphi 0, %s46
    %s61 = sphi 0, %s47
    %s65 = sphi 0, %s65
    %s67 = sphi 0, %s65
    %s68 = sphi 0, %s67
    %s82 = sphi 0, %s68
    %s86 = sphi 0, %s86
    %s88 = sphi 0, %s86
    %s89 = sphi 0, %s88
    %s103 = sphi 0, %s89
    %s109 = sphi 0, %s111
    %s112 = sphi 0, %s109
    %s113 = sphi 0, %s112
    %s129 = sphi 0, %s113
  $region4: #{tpu_custom_call.1} parent=0 // loop_header_branch
    %13 = sbr.rel (%p11) target = $region8
  $region5: #{tpu_custom_call.1} parent=0 // loop_body
    %s15 = ssub.s32 %s10, 1
    %s16 = ssub.s32 %s10, 2
    %s17 = sadd.s32 %s10, 1
    %s18 = ssub.s32 %s10, %s17
    %p19 = scmp.eq.s32.totalorder %s18, 0
    %s21 = sadd.s32 %s20, 1
    %s22 = scalar_select %p19, %s20, %s21
    %p25 = pneg %p19
    %p26 = scmp.eq.s32.totalorder %s10, 1
    %p27 = por %p25, %p26
    %p28 = scmp.ne.s32.totalorder %s20, %s23
    %p29 = scmp.eq.s32.totalorder %s10, 0
    %p30 = por %p28, %p29
    %p31 = scmp.ne.s32.totalorder %s20, %s23
    %p32 = scmp.eq.s32.totalorder %s15, 1
    %p33 = por %p31, %p32
    %p34 = scmp.ne.s32.totalorder %s23, %s24
    %p35 = scmp.eq.s32.totalorder %s15, 0
    %p36 = por %p34, %p35
    %p37 = scmp.ne.s32.totalorder %s23, %s24
    %p38 = scmp.eq.s32.totalorder %s16, 1
    %p39 = por %p37, %p38
    %p41 = scmp.ne.s32.totalorder %s24, %s40
    %p42 = scmp.eq.s32.totalorder %s16, 0
    %p43 = por %p41, %p42
    %s45 = sadd.s32 %s44, 1
    %p48 = scmp.eq.s32.totalorder %s10, 1
    %p49 = scmp.ne.s32.totalorder %s44, %s46
    %p50 = scmp.eq.s32.totalorder %s10, 0
    %p51 = por %p49, %p50
    %p52 = scmp.ne.s32.totalorder %s44, %s46
    %p53 = scmp.eq.s32.totalorder %s15, 1
    %p54 = por %p52, %p53
    %p55 = scmp.ne.s32.totalorder %s46, %s47
    %p56 = scmp.eq.s32.totalorder %s15, 0
    %p57 = por %p55, %p56
    %p58 = scmp.ne.s32.totalorder %s46, %s47
    %p59 = scmp.eq.s32.totalorder %s16, 1
    %p60 = por %p58, %p59
    %p62 = scmp.ne.s32.totalorder %s47, %s61
    %p63 = scmp.eq.s32.totalorder %s16, 0
    %p64 = por %p62, %p63
    %s66 = sadd.s32 %s65, 1
    %p69 = scmp.eq.s32.totalorder %s10, 1
    %p70 = scmp.ne.s32.totalorder %s65, %s67
    %p71 = scmp.eq.s32.totalorder %s10, 0
    %p72 = por %p70, %p71
    %p73 = scmp.ne.s32.totalorder %s65, %s67
    %p74 = scmp.eq.s32.totalorder %s15, 1
    %p75 = por %p73, %p74
    %p76 = scmp.ne.s32.totalorder %s67, %s68
    %p77 = scmp.eq.s32.totalorder %s15, 0
    %p78 = por %p76, %p77
    %p79 = scmp.ne.s32.totalorder %s67, %s68
    %p80 = scmp.eq.s32.totalorder %s16, 1
    %p81 = por %p79, %p80
    %p83 = scmp.ne.s32.totalorder %s68, %s82
    %p84 = scmp.eq.s32.totalorder %s16, 0
    %p85 = por %p83, %p84
    %s87 = sadd.s32 %s86, 1
    %p90 = scmp.eq.s32.totalorder %s10, 1
    %p91 = scmp.ne.s32.totalorder %s86, %s88
    %p92 = scmp.eq.s32.totalorder %s10, 0
    %p93 = por %p91, %p92
    %p94 = scmp.ne.s32.totalorder %s86, %s88
    %p95 = scmp.eq.s32.totalorder %s15, 1
    %p96 = por %p94, %p95
    %p97 = scmp.ne.s32.totalorder %s88, %s89
    %p98 = scmp.eq.s32.totalorder %s15, 0
    %p99 = por %p97, %p98
    %p100 = scmp.ne.s32.totalorder %s88, %s89
    %p101 = scmp.eq.s32.totalorder %s16, 1
    %p102 = por %p100, %p101
    %p104 = scmp.ne.s32.totalorder %s89, %s103
    %p105 = scmp.eq.s32.totalorder %s16, 0
    %p106 = por %p104, %p105
    %s107 = ssub.s32 %s10, %s17
    %p108 = scmp.eq.s32.totalorder %s107, 0
    %s110 = sadd.s32 %s109, 1
    %s111 = scalar_select %p108, %s109, %s110
    %p114 = pneg %p108
    %p115 = scmp.eq.s32.totalorder %s10, 1
    %p116 = por %p114, %p115
    %p117 = scmp.ne.s32.totalorder %s109, %s112
    %p118 = scmp.eq.s32.totalorder %s10, 0
    %p119 = por %p117, %p118
    %p120 = scmp.ne.s32.totalorder %s109, %s112
    %p121 = scmp.eq.s32.totalorder %s15, 1
    %p122 = por %p120, %p121
    %p123 = scmp.ne.s32.totalorder %s112, %s113
    %p124 = scmp.eq.s32.totalorder %s15, 0
    %p125 = por %p123, %p124
    %p126 = scmp.ne.s32.totalorder %s112, %s113
    %p127 = scmp.eq.s32.totalorder %s16, 1
    %p128 = por %p126, %p127
    %p130 = scmp.ne.s32.totalorder %s113, %s129
    %p131 = scmp.eq.s32.totalorder %s16, 0
    %p132 = por %p130, %p131
    %p133 = scmp.le.s32.totalorder 1, %s10
    %p134 = scmp.lt.s32.totalorder %s10, 3
    %p135 = pnand %p133, %p134
    %p136 = pneg %p135
    // Predicated region
    $region9: #{tpu_custom_call.1} parent=5 // pred_check
      _
    $region10: #{tpu_custom_call.1} parent=5 // pred_check_branch
      %138 = sbr.rel (%p135) target = $region12
    $region11: #{tpu_custom_call.1} parent=5 // pred_region
      %s139 = ssub.s32 %s10, 1
      // Predicated region
      $region13: #{tpu_custom_call.1} parent=11 // pred_check
        %p140 = pneg %p57
      $region14: #{tpu_custom_call.1} parent=11 // pred_check_branch
        %142 = sbr.rel (%p140) target = $region16
      $region15: #{tpu_custom_call.1} parent=11 // pred_region
        _
      $region16: #{tpu_custom_call.1} parent=11 // pred_fallthru
        _
      // Predicated region
      $region17: #{tpu_custom_call.1} parent=11 // pred_check
        %p143 = pneg %p78
      $region18: #{tpu_custom_call.1} parent=11 // pred_check_branch
        %145 = sbr.rel (%p143) target = $region20
      $region19: #{tpu_custom_call.1} parent=11 // pred_region
        _
      $region20: #{tpu_custom_call.1} parent=11 // pred_fallthru
        _
      // Predicated region
      $region21: #{tpu_custom_call.1} parent=11 // pred_check
        %p146 = pneg %p99
      $region22: #{tpu_custom_call.1} parent=11 // pred_check_branch
        %148 = sbr.rel (%p146) target = $region24
      $region23: #{tpu_custom_call.1} parent=11 // pred_region
        _
      $region24: #{tpu_custom_call.1} parent=11 // pred_fallthru
        _
    $region12: #{tpu_custom_call.1} parent=5 // pred_fallthru
      _
    %p149 = scmp.lt.s32.totalorder %s10, 2
    // Predicated region
    $region25: #{tpu_custom_call.1} parent=5 // pred_check
      %p150 = pneg %p149
    $region26: #{tpu_custom_call.1} parent=5 // pred_check_branch
      %152 = sbr.rel (%p150) target = $region28
    $region27: #{tpu_custom_call.1} parent=5 // pred_region
      // Predicated region
      $region29: #{tpu_custom_call.1} parent=27 // pred_check
        %p153 = pneg %p30
      $region30: #{tpu_custom_call.1} parent=27 // pred_check_branch
        %155 = sbr.rel (%p153) target = $region32
      $region31: #{tpu_custom_call.1} parent=27 // pred_region
        %s156 = smul.u32 8, %s10
        %p157 = scmp.lt.s32.totalorder %s156, 15
        %s158 = scalar_select %p157, %s156, 15
        %s159 = smul.addr %s158, 8
        %s160 = scalar_lea.vmem %s0, %s159
        %s161 = smul.u32 8, %s10
      $region32: #{tpu_custom_call.1} parent=27 // pred_fallthru
        _
    $region28: #{tpu_custom_call.1} parent=5 // pred_fallthru
      _
    %p162 = scmp.le.s32.totalorder 1, %s10
    %p163 = scmp.lt.s32.totalorder %s10, 3
    %p164 = pnand %p162, %p163
    %p165 = pneg %p164
    // Predicated region
    $region33: #{tpu_custom_call.1} parent=5 // pred_check
      _
    $region34: #{tpu_custom_call.1} parent=5 // pred_check_branch
      %167 = sbr.rel (%p164) target = $region36
    $region35: #{tpu_custom_call.1} parent=5 // pred_region
      %s168 = ssub.s32 %s10, 1
      %s169 = smul.u32 8, %s15
      %p170 = scmp.lt.s32.totalorder %s169, 15
      %s171 = scalar_select %p170, %s169, 15
      %s172 = smul.addr %s171, 8
      %s173 = scalar_lea.vmem %s0, %s172
      %p174 = pneg %p36
      %p175 = pneg %p33
      %p176 = pneg %p57
      %p177 = pneg %p54
      %p178 = pneg %p78
      %p179 = pneg %p75
      %p180 = pneg %p99
      %p181 = pneg %p96
      %p182 = pneg %p125
      %p183 = pneg %p122
      %s184 = smul.u32 8, %s15
      %p185 = scmp.lt.s32.totalorder %s184, 15
      %s186 = scalar_select %p185, %s184, 15
      %s187 = smul.addr %s186, 8
      %s188 = scalar_lea.vmem %s4, %s187
      %s189 = smul.u32 8, %s15
      %p190 = scmp.lt.s32.totalorder %s189, 15
      %s191 = scalar_select %p190, %s189, 15
      %s192 = smul.addr %s191, 8
      %s193 = scalar_lea.vmem %s0, %s192
      %s194 = smul.u32 8, %s15
      %s195 = smul.u32 8, %s15
      %p196 = scmp.lt.s32.totalorder %s195, 15
      %s197 = scalar_select %p196, %s195, 15
      %s198 = smul.addr %s197, 8
      %s199 = scalar_lea.vmem %s4, %s198
      %s200 = smul.u32 8, %s15
      %v201 = vld [vmem:[%s193] sm:$0xff]
      %v202 = vld [vmem:[%s193 + $0x8] sm:$0xff]
      %v203 = vld [vmem:[%s193 + $0x10] sm:$0xff]
      %v204 = vld [vmem:[%s193 + $0x18] sm:$0xff]
      %v205 = vld [vmem:[%s193 + $0x20] sm:$0xff]
      %v206 = vld [vmem:[%s193 + $0x28] sm:$0xff]
      %v207 = vld [vmem:[%s193 + $0x30] sm:$0xff]
      %v208 = vld [vmem:[%s193 + $0x38] sm:$0xff]
      %v209 = vld [vmem:[%s1] sm:$0xff]
      %v210 = vld [vmem:[%s1 + $0x8] sm:$0xff]
      %vm211 = vcmask 130048
      %v213 = vsel %vm211, %v201, 0
      %v216 = vsel %vm211, %v202, 0
      %v219 = vsel %vm211, %v203, 0
      %v222 = vsel %vm211, %v204, 0
      %v225 = vsel %vm211, %v205, 0
      %v228 = vsel %vm211, %v206, 0
      %v231 = vsel %vm211, %v207, 0
      %v234 = vsel %vm211, %v208, 0
      %236 = vmatpush.msra.mxu0 0.0
      %237 = vmatpush.msra.mxu0 0.0
      %238 = vmatpush.msra.mxu0 0.0
      %239 = vmatpush.msra.mxu0 0.0
      %240 = vmatpush.msra.mxu0 0.0
      %241 = vmatpush.msra.mxu0 0.0
      %242 = vmatpush.msra.mxu0 0.0
      %243 = vmatpush.msra.mxu0 0.0
      %244 = vmatpush.msra.mxu0 0.0
      %245 = vmatpush.msra.mxu0 0.0
      %246 = vmatpush.msra.mxu0 0.0
      %247 = vmatpush.msra.mxu0 0.0
      %248 = vmatpush.msra.mxu0 0.0
      %249 = vmatpush.msra.mxu0 0.0
      %250 = vmatpush.msra.mxu0 %v210
      %251 = vmatpush.msra.mxu0 %v209
      %252 = vmatmul.f32.gmra.mxu0 %v213
      %v253 = vpop.f32.mrf.mxu0
      %v254 = vadd.f32 0.0, %v253
      %255 = vmatmul.f32.gmra.mxu0 %v216
      %v256 = vpop.f32.mrf.mxu0
      %v257 = vadd.f32 0.0, %v256
      %258 = vmatmul.f32.gmra.mxu0 %v219
      %v259 = vpop.f32.mrf.mxu0
      %v260 = vadd.f32 0.0, %v259
      %261 = vmatmul.f32.gmra.mxu0 %v222
      %v262 = vpop.f32.mrf.mxu0
      %v263 = vadd.f32 0.0, %v262
      %264 = vmatmul.f32.gmra.mxu0 %v225
      %v265 = vpop.f32.mrf.mxu0
      %v266 = vadd.f32 0.0, %v265
      %267 = vmatmul.f32.gmra.mxu0 %v228
      %v268 = vpop.f32.mrf.mxu0
      %v269 = vadd.f32 0.0, %v268
      %270 = vmatmul.f32.gmra.mxu0 %v231
      %v271 = vpop.f32.mrf.mxu0
      %v272 = vadd.f32 0.0, %v271
      %273 = vmatmul.f32.gmra.mxu0 %v234
      %v274 = vpop.f32.mrf.mxu0
      %v275 = vadd.f32 0.0, %v274
      %276 = vdwg.mxu0
      %v277 = vmax.f32 %v254, 0.0
      %v278 = vmax.f32 %v257, 0.0
      %v279 = vmax.f32 %v260, 0.0
      %v280 = vmax.f32 %v263, 0.0
      %v281 = vmax.f32 %v266, 0.0
      %v282 = vmax.f32 %v269, 0.0
      %v283 = vmax.f32 %v272, 0.0
      %v284 = vmax.f32 %v275, 0.0
      %v285 = vld [vmem:[%s2] sm:$0xff]
      %v286 = vld [vmem:[%s2 + $0x8] sm:$0xff]
      %v287 = vld [vmem:[%s2 + $0x10] sm:$0xff]
      %v288 = vld [vmem:[%s2 + $0x18] sm:$0xff]
      %vm289 = vcmask 261120
      %v291 = vsel %vm289, %v277, 0
      %v294 = vsel %vm289, %v278, 0
      %v297 = vsel %vm289, %v279, 0
      %v300 = vsel %vm289, %v280, 0
      %v303 = vsel %vm289, %v281, 0
      %v306 = vsel %vm289, %v282, 0
      %v309 = vsel %vm289, %v283, 0
      %v312 = vsel %vm289, %v284, 0
      %314 = vmatpush.msra.mxu0 0.0
      %315 = vmatpush.msra.mxu0 0.0
      %316 = vmatpush.msra.mxu0 0.0
      %317 = vmatpush.msra.mxu0 0.0
      %318 = vmatpush.msra.mxu0 0.0
      %319 = vmatpush.msra.mxu0 0.0
      %320 = vmatpush.msra.mxu0 0.0
      %321 = vmatpush.msra.mxu0 0.0
      %322 = vmatpush.msra.mxu0 0.0
      %323 = vmatpush.msra.mxu0 0.0
      %324 = vmatpush.msra.mxu0 0.0
      %325 = vmatpush.msra.mxu0 0.0
      %326 = vmatpush.msra.mxu0 %v288
      %327 = vmatpush.msra.mxu0 %v287
      %328 = vmatpush.msra.mxu0 %v286
      %329 = vmatpush.msra.mxu0 %v285
      %330 = vmatmul.f32.gmra.mxu0 %v291
      %v331 = vpop.f32.mrf.mxu0
      %v332 = vadd.f32 0.0, %v331
      %333 = vmatmul.f32.gmra.mxu0 %v294
      %v334 = vpop.f32.mrf.mxu0
      %v335 = vadd.f32 0.0, %v334
      %336 = vmatmul.f32.gmra.mxu0 %v297
      %v337 = vpop.f32.mrf.mxu0
      %v338 = vadd.f32 0.0, %v337
      %339 = vmatmul.f32.gmra.mxu0 %v300
      %v340 = vpop.f32.mrf.mxu0
      %v341 = vadd.f32 0.0, %v340
      %342 = vmatmul.f32.gmra.mxu0 %v303
      %v343 = vpop.f32.mrf.mxu0
      %v344 = vadd.f32 0.0, %v343
      %345 = vmatmul.f32.gmra.mxu0 %v306
      %v346 = vpop.f32.mrf.mxu0
      %v347 = vadd.f32 0.0, %v346
      %348 = vmatmul.f32.gmra.mxu0 %v309
      %v349 = vpop.f32.mrf.mxu0
      %v350 = vadd.f32 0.0, %v349
      %351 = vmatmul.f32.gmra.mxu0 %v312
      %v352 = vpop.f32.mrf.mxu0
      %v353 = vadd.f32 0.0, %v352
      %354 = vdwg.mxu0
      %v355 = vmax.f32 %v332, 0.0
      %v356 = vmax.f32 %v335, 0.0
      %v357 = vmax.f32 %v338, 0.0
      %v358 = vmax.f32 %v341, 0.0
      %v359 = vmax.f32 %v344, 0.0
      %v360 = vmax.f32 %v347, 0.0
      %v361 = vmax.f32 %v350, 0.0
      %v362 = vmax.f32 %v353, 0.0
      %v363 = vld [vmem:[%s3] sm:$0xff]
      %v364 = vld [vmem:[%s3 + $0x8] sm:$0xff]
      %v365 = vld [vmem:[%s3 + $0x10] sm:$0xff]
      %v366 = vld [vmem:[%s3 + $0x18] sm:$0xff]
      %v368 = vsel %vm289, %v355, 0
      %v371 = vsel %vm289, %v356, 0
      %v374 = vsel %vm289, %v357, 0
      %v377 = vsel %vm289, %v358, 0
      %v380 = vsel %vm289, %v359, 0
      %v383 = vsel %vm289, %v360, 0
      %v386 = vsel %vm289, %v361, 0
      %v389 = vsel %vm289, %v362, 0
      %391 = vmatpush.msra.mxu0 0.0
      %392 = vmatpush.msra.mxu0 0.0
      %393 = vmatpush.msra.mxu0 0.0
      %394 = vmatpush.msra.mxu0 0.0
      %395 = vmatpush.msra.mxu0 0.0
      %396 = vmatpush.msra.mxu0 0.0
      %397 = vmatpush.msra.mxu0 0.0
      %398 = vmatpush.msra.mxu0 0.0
      %399 = vmatpush.msra.mxu0 0.0
      %400 = vmatpush.msra.mxu0 0.0
      %401 = vmatpush.msra.mxu0 0.0
      %402 = vmatpush.msra.mxu0 0.0
      %403 = vmatpush.msra.mxu0 %v366
      %404 = vmatpush.msra.mxu0 %v365
      %405 = vmatpush.msra.mxu0 %v364
      %406 = vmatpush.msra.mxu0 %v363
      %407 = vmatmul.f32.gmra.mxu0 %v368
      %v408 = vpop.f32.mrf.mxu0
      %v409 = vadd.f32 0.0, %v408
      %410 = vmatmul.f32.gmra.mxu0 %v371
      %v411 = vpop.f32.mrf.mxu0
      %v412 = vadd.f32 0.0, %v411
      %413 = vmatmul.f32.gmra.mxu0 %v374
      %v414 = vpop.f32.mrf.mxu0
      %v415 = vadd.f32 0.0, %v414
      %416 = vmatmul.f32.gmra.mxu0 %v377
      %v417 = vpop.f32.mrf.mxu0
      %v418 = vadd.f32 0.0, %v417
      %419 = vmatmul.f32.gmra.mxu0 %v380
      %v420 = vpop.f32.mrf.mxu0
      %v421 = vadd.f32 0.0, %v420
      %422 = vmatmul.f32.gmra.mxu0 %v383
      %v423 = vpop.f32.mrf.mxu0
      %v424 = vadd.f32 0.0, %v423
      %425 = vmatmul.f32.gmra.mxu0 %v386
      %v426 = vpop.f32.mrf.mxu0
      %v427 = vadd.f32 0.0, %v426
      %428 = vmatmul.f32.gmra.mxu0 %v389
      %v429 = vpop.f32.mrf.mxu0
      %v430 = vadd.f32 0.0, %v429
      %431 = vdwg.mxu0
      %v432 = vmax.f32 %v409, 0.0
      %v433 = vmax.f32 %v412, 0.0
      %v434 = vmax.f32 %v415, 0.0
      %v435 = vmax.f32 %v418, 0.0
      %v436 = vmax.f32 %v421, 0.0
      %v437 = vmax.f32 %v424, 0.0
      %v438 = vmax.f32 %v427, 0.0
      %v439 = vmax.f32 %v430, 0.0
      %440 = vst.msk [vmem:[%s199] sm:$0xff] %vm289, %v432
      %441 = vst.msk [vmem:[%s199 + $0x8] sm:$0xff] %vm289, %v433
      %442 = vst.msk [vmem:[%s199 + $0x10] sm:$0xff] %vm289, %v434
      %443 = vst.msk [vmem:[%s199 + $0x18] sm:$0xff] %vm289, %v435
      %444 = vst.msk [vmem:[%s199 + $0x20] sm:$0xff] %vm289, %v436
      %445 = vst.msk [vmem:[%s199 + $0x28] sm:$0xff] %vm289, %v437
      %446 = vst.msk [vmem:[%s199 + $0x30] sm:$0xff] %vm289, %v438
      %447 = vst.msk [vmem:[%s199 + $0x38] sm:$0xff] %vm289, %v439
      %s448 = smul.u32 8, %s15
      %p449 = scmp.lt.s32.totalorder %s448, 15
      %s450 = scalar_select %p449, %s448, 15
      %s451 = smul.addr %s450, 8
      %s452 = scalar_lea.vmem %s4, %s451
      // Predicated region
      $region37: #{tpu_custom_call.1} parent=35 // pred_check
        %p453 = pneg %p122
      $region38: #{tpu_custom_call.1} parent=35 // pred_check_branch
        %455 = sbr.rel (%p453) target = $region40
      $region39: #{tpu_custom_call.1} parent=35 // pred_region
        %s456 = smul.u32 8, %s15
      $region40: #{tpu_custom_call.1} parent=35 // pred_fallthru
        _
    $region36: #{tpu_custom_call.1} parent=5 // pred_fallthru
      _
    %p457 = scmp.le.s32.totalorder 2, %s10
    // Predicated region
    $region41: #{tpu_custom_call.1} parent=5 // pred_check
      %p458 = pneg %p457
    $region42: #{tpu_custom_call.1} parent=5 // pred_check_branch
      %460 = sbr.rel (%p458) target = $region44
    $region43: #{tpu_custom_call.1} parent=5 // pred_region
      %s461 = ssub.s32 %s10, 2
      // Predicated region
      $region45: #{tpu_custom_call.1} parent=43 // pred_check
        %p462 = pneg %p128
      $region46: #{tpu_custom_call.1} parent=43 // pred_check_branch
        %464 = sbr.rel (%p462) target = $region48
      $region47: #{tpu_custom_call.1} parent=43 // pred_region
        %s465 = smul.u32 8, %s16
        %p466 = scmp.lt.s32.totalorder %s465, 15
        %s467 = scalar_select %p466, %s465, 15
        %s468 = smul.addr %s467, 8
        %s469 = scalar_lea.vmem %s4, %s468
      $region48: #{tpu_custom_call.1} parent=43 // pred_fallthru
        _
    $region44: #{tpu_custom_call.1} parent=5 // pred_fallthru
      _
  $region6: #{tpu_custom_call.1} parent=0 // loop_footer
    %s14 = sadd.s32 1, %s10
  $region7: #{tpu_custom_call.1} parent=0 // loop_footer_branch
    %9 = sbr.rel target = $region3
  $region8: #{tpu_custom_call.1} parent=0 // loop_exit
    _

</llo_original>
